<compile_context>
chip_gen: v6e
topology: v6e:2x2x1
jax: 0.10.0
libtpu: 0.0.40
codegen_flags: <defaults>
</compile_context>

<pallas_src>
import numpy as np
import jax
import jax.numpy as jnp
from jax.experimental import pallas as pl
from jax.experimental.pallas import tpu as pltpu

_LANE = 128


# ---------------------------------------------------------------------------
# Kernels
# ---------------------------------------------------------------------------
def _slab_gather_kernel(perm_ref, x_ref, o_ref):
    """Full-channel-slab gather: o[:, c] = x[:, perm[c]] at VMEM bandwidth.

    x_ref / o_ref: (Bt, C, S, L) VMEM blocks.  The channel axis is an untiled
    (non-minor) axis, so the dynamic source index is a pure address offset.
    perm_ref: (C,) int32 scalar-prefetch ref living in SMEM.
    """
    C = x_ref.shape[1]
    if C <= 32:
        # Small channel counts (4 / 8 in this model): fully unrolled.
        for c in range(C):
            o_ref[:, c] = x_ref[:, perm_ref[c]]
    else:
        def body(c, carry):
            o_ref[:, c] = x_ref[:, perm_ref[c]]
            return carry
        jax.lax.fori_loop(0, C, body, 0)


def _channel_copy_kernel(perm_ref, x_ref, o_ref):
    # Per-channel fallback: the gather already happened in the input index_map
    # (perm_ref[c] picked the source channel block), so the body is a pure copy.
    del perm_ref
    o_ref[...] = x_ref[...]


# ---------------------------------------------------------------------------
# VMEM budgeting helpers
# ---------------------------------------------------------------------------
def _tpu_vmem_capacity_bytes():
    try:
        return int(pltpu.get_tpu_info().vmem_capacity_bytes)
    except Exception:
        return 64 * 1024 * 1024  # conservative (v7x physical VMEM per core)


def _block_budget_bytes():
    # Explicit 4x factor: double-buffered input + double-buffered output.
    # Keep 4*block <= 12 MiB so we stay under v5e's 16 MiB scoped-VMEM default
    # and well under v7x's smaller VMEM, with headroom for other scratch.
    cap = _tpu_vmem_capacity_bytes()
    return min(cap // 16, 3 * 1024 * 1024)


def _sublane_multiple(itemsize):
    return {4: 8, 2: 16, 1: 32}.get(itemsize, 8)


# ---------------------------------------------------------------------------
# Wrapper
# ---------------------------------------------------------------------------
def permute_channels(x, perm, *, _force_per_channel=False):
    """y[b, c, ...] = x[b, perm[c], ...]  (equivalent to torch x[:, perm])."""
    perm = jnp.asarray(perm, dtype=jnp.int32)

    if x.ndim == 2:
        # permute3-style (B, D): the permuted axis IS the lane axis.  A plain
        # XLA gather is already a single lane-dense HBM pass (~100x less HBM
        # traffic than padding each scalar to 128 lanes).
        # TODO(synk): dedicated in-VMEM lane-gather Pallas kernel for 2-D inputs.
        return jnp.take(x, perm, axis=1)

    B, C = x.shape[0], x.shape[1]
    spatial = x.shape[2:]
    HW = int(np.prod(spatial)) if spatial else 1
    itemsize = x.dtype.itemsize

    # Pad-free, lane-dense 4-D view (metadata-only reshape): channel stays on
    # an untiled axis, the last two dims always cover the full spatial extent,
    # so the (8, 128) BlockSpec constraint is satisfied without any HBM pad.
    if HW % _LANE == 0:
        S, L = HW // _LANE, _LANE     # fully lane-dense rows
    else:
        S, L = 1, HW                  # ragged lane tail handled by Mosaic
    xv = x.reshape(B, C, S, L)

    # VMEM footprint per channel slab / per batch row, accounting for the
    # (sublane, lane) tile padding Mosaic will actually allocate.
    sub_mult = _sublane_multiple(itemsize)
    sub_pad = pl.cdiv(S, sub_mult) * sub_mult
    lane_pad = pl.cdiv(L, _LANE) * _LANE
    chan_vmem = sub_pad * lane_pad * itemsize
    row_vmem = C * chan_vmem
    budget = _block_budget_bytes()

    cost = pl.CostEstimate(
        flops=0,
        transcendentals=0,
        bytes_accessed=int(2 * B * C * HW * itemsize + perm.size * 4),
    )

    if row_vmem <= budget and not _force_per_channel:
        yv = _permute_full_slab(xv, perm, budget, row_vmem, cost)
    else:
        yv = _permute_per_channel(xv, perm, budget, chan_vmem, cost)
    return yv.reshape(x.shape)


def _permute_full_slab(xv, perm, budget, row_vmem, cost):
    """Primary path: one (Bt, C, S, L) block per step, gather done in VMEM."""
    B, C, S, L = xv.shape
    Bt = max(1, min(B, budget // row_vmem))
    if Bt >= B and B > 1:
        # Keep at least two batch blocks so v7x megacore can split the
        # (parallel) grid across its two TensorCores (neutral on v5e/v6e).
        Bt = (B + 1) // 2
    nb = pl.cdiv(B, Bt)

    in_spec_kwargs = {}
    if nb >= 8 and Bt * row_vmem <= 256 * 1024:
        # Tiny blocks => issue-latency-bound pipeline; a third in-flight
        # buffer hides DMA startup.  Gated so the extra buffer always fits.
        in_spec_kwargs["pipeline_mode"] = pl.Buffered(3)

    grid_spec = pltpu.PrefetchScalarGridSpec(
        num_scalar_prefetch=1,
        grid=(nb,),
        in_specs=[
            pl.BlockSpec((Bt, C, S, L),
                         lambda b, perm_ref: (b, 0, 0, 0),
                         **in_spec_kwargs),
        ],
        out_specs=pl.BlockSpec((Bt, C, S, L),
                               lambda b, perm_ref: (b, 0, 0, 0)),
    )
    return pl.pallas_call(
        _slab_gather_kernel,
        out_shape=jax.ShapeDtypeStruct(xv.shape, xv.dtype),
        grid_spec=grid_spec,
        compiler_params=pltpu.CompilerParams(dimension_semantics=("parallel",)),
        cost_estimate=cost,
    )(perm, xv)


def _permute_per_channel(xv, perm, budget, chan_vmem, cost):
    """Fallback for channel slabs too large for VMEM: DMA-level gather via the
    input index_map, one (Bt, 1, S, L) block per (batch-tile, channel) step."""
    B, C, S, L = xv.shape
    Bt = max(1, min(B, budget // chan_vmem))
    nb = pl.cdiv(B, Bt)

    cp_kwargs = dict(dimension_semantics=("parallel", "parallel"))
    block_bytes = Bt * chan_vmem
    if 4 * block_bytes > 12 * 1024 * 1024:
        # A single channel slab blows the budget (huge HW): raise the scoped
        # VMEM limit explicitly (v5e's default is only 16 MiB).
        cap = _tpu_vmem_capacity_bytes()
        cp_kwargs["vmem_limit_bytes"] = int(
            min(4 * block_bytes + (4 << 20), cap * 3 // 4))

    grid_spec = pltpu.PrefetchScalarGridSpec(
        num_scalar_prefetch=1,
        grid=(nb, C),
        in_specs=[
            pl.BlockSpec((Bt, 1, S, L),
                         lambda b, c, perm_ref: (b, perm_ref[c], 0, 0)),
        ],
        out_specs=pl.BlockSpec((Bt, 1, S, L),
                               lambda b, c, perm_ref: (b, c, 0, 0)),
    )
    return pl.pallas_call(
        _channel_copy_kernel,
        out_shape=jax.ShapeDtypeStruct(xv.shape, xv.dtype),
        grid_spec=grid_spec,
        compiler_params=pltpu.CompilerParams(**cp_kwargs),
        cost_estimate=cost,
    )(perm, xv)


class PermuteData:
    """JAX/Pallas port of models/main_model.py::Permute_data (forward pass)."""

    def __init__(self, input_data, seed):
        np.random.seed(seed)
        self.permute_data = np.random.permutation(input_data).astype(np.int32)
        np.random.seed()
        permute_sample = np.zeros_like(self.permute_data)
        for i, j in enumerate(self.permute_data):
            permute_sample[j] = i
        self.permute_sample = permute_sample.astype(np.int32)

    def __call__(self, x, sample_the_data=False):
        perm = self.permute_sample if sample_the_data else self.permute_data
        return permute_channels(x, jnp.asarray(perm))


if __name__ == "__main__":
    key = jax.random.PRNGKey(0)
    k1, k2, k3 = jax.random.split(key, 3)

    # --- block-2 style input: (B, C, H, W) = (2, 4, 16, 16), HW % 128 == 0 ---
    x4 = jax.random.normal(k1, (2, 4, 16, 16), dtype=jnp.float32)
    mod4 = PermuteData(input_data=4, seed=0)
    y4 = jax.block_until_ready(mod4(x4, sample_the_data=False))
    y4i = jax.block_until_ready(mod4(x4, sample_the_data=True))
    ref4 = x4[:, jnp.asarray(mod4.permute_data)]
    ref4i = x4[:, jnp.asarray(mod4.permute_sample)]
    assert jnp.array_equal(y4, ref4), "4D forward permutation mismatch"
    assert jnp.array_equal(y4i, ref4i), "4D inverse permutation mismatch"
    rt4 = jax.block_until_ready(mod4(y4, sample_the_data=True))
    assert jnp.array_equal(rt4, x4), "4D round-trip mismatch"

    # --- block-3 style input: (2, 8, 8, 8), HW = 64 (not a multiple of 128) ---
    x8 = jax.random.normal(k2, (2, 8, 8, 8), dtype=jnp.float32)
    mod8 = PermuteData(input_data=8, seed=3)
    y8 = jax.block_until_ready(mod8(x8))
    assert jnp.array_equal(y8, x8[:, jnp.asarray(mod8.permute_data)]), "8ch fwd mismatch"
    rt8 = jax.block_until_ready(mod8(y8, sample_the_data=True))
    assert jnp.array_equal(rt8, x8), "8ch round-trip mismatch"

    # --- exercise the per-channel DMA-gather fallback path explicitly ---
    yfb = jax.block_until_ready(
        permute_channels(x4, jnp.asarray(mod4.permute_data),
                         _force_per_channel=True))
    assert jnp.array_equal(yfb, ref4), "per-channel fallback mismatch"

    # --- permute3 style 2-D input: (B, D) = (2, 1024) (XLA gather path) ---
    xf = jax.random.normal(k3, (2, 1024), dtype=jnp.float32)
    modf = PermuteData(input_data=1024, seed=0)
    yf = jax.block_until_ready(modf(xf))
    assert jnp.array_equal(yf, xf[:, jnp.asarray(modf.permute_data)]), "2D fwd mismatch"
    rtf = jax.block_until_ready(modf(yf, sample_the_data=True))
    assert jnp.array_equal(rtf, xf), "2D round-trip mismatch"

    print("KERNEL_OK")
</pallas_src>

<mosaic_0001>
module attributes {stable_mosaic.version = 11 : i64} {
  func.func @_slab_gather_kernel(%arg0: i32, %arg1: memref<4xi32, #tpu.memory_space<smem>>, %arg2: memref<1x4x2x128xf32, #tpu.memory_space<vmem>>, %arg3: memref<1x4x2x128xf32, #tpu.memory_space<vmem>>) attributes {dimension_semantics = [#tpu.dimension_semantics<parallel>], iteration_bounds = array<i64: 2>, scalar_prefetch = 1 : i64, scratch_operands = 0 : i64, tpu.core_type = #tpu.core_type<tc>, window_params = [{transform_indices = @transform_0, window_bounds = array<i64: 1, 4, 2, 128>}, {transform_indices = @transform_1, window_bounds = array<i64: 1, 4, 2, 128>}]} {
    %c0 = arith.constant 0 : index
    %0 = memref.load %arg1[%c0] : memref<4xi32, #tpu.memory_space<smem>>
    %c0_0 = arith.constant 0 : index
    %1 = arith.index_cast %0 : i32 to index
    %c0_1 = arith.constant 0 : index
    %c0_2 = arith.constant 0 : index
    %2 = vector.load %arg2[%c0_0, %1, %c0_1, %c0_2] : memref<1x4x2x128xf32, #tpu.memory_space<vmem>>, vector<1x1x2x128xf32>
    %3 = vector.shape_cast %2 : vector<1x1x2x128xf32> to vector<1x2x128xf32>
    %c0_3 = arith.constant 0 : index
    %c0_4 = arith.constant 0 : index
    %c0_5 = arith.constant 0 : index
    %c0_6 = arith.constant 0 : index
    %4 = vector.load %arg3[%c0_3, %c0_4, %c0_5, %c0_6] : memref<1x4x2x128xf32, #tpu.memory_space<vmem>>, vector<1x1x2x128xf32>
    %5 = vector.shape_cast %4 : vector<1x1x2x128xf32> to vector<1x2x128xf32>
    %6 = vector.shape_cast %3 : vector<1x2x128xf32> to vector<1x1x2x128xf32>
    tpu.vector_store %arg3[%c0_3, %c0_4, %c0_5, %c0_6], %6 {strides = array<i32>} : memref<1x4x2x128xf32, #tpu.memory_space<vmem>>, vector<1x1x2x128xf32>,
    %c1 = arith.constant 1 : index
    %7 = memref.load %arg1[%c1] : memref<4xi32, #tpu.memory_space<smem>>
    %c0_7 = arith.constant 0 : index
    %8 = arith.index_cast %7 : i32 to index
    %c0_8 = arith.constant 0 : index
    %c0_9 = arith.constant 0 : index
    %9 = vector.load %arg2[%c0_7, %8, %c0_8, %c0_9] : memref<1x4x2x128xf32, #tpu.memory_space<vmem>>, vector<1x1x2x128xf32>
    %10 = vector.shape_cast %9 : vector<1x1x2x128xf32> to vector<1x2x128xf32>
    %c0_10 = arith.constant 0 : index
    %c1_11 = arith.constant 1 : index
    %c0_12 = arith.constant 0 : index
    %c0_13 = arith.constant 0 : index
    %11 = vector.load %arg3[%c0_10, %c1_11, %c0_12, %c0_13] : memref<1x4x2x128xf32, #tpu.memory_space<vmem>>, vector<1x1x2x128xf32>
    %12 = vector.shape_cast %11 : vector<1x1x2x128xf32> to vector<1x2x128xf32>
    %13 = vector.shape_cast %10 : vector<1x2x128xf32> to vector<1x1x2x128xf32>
    tpu.vector_store %arg3[%c0_10, %c1_11, %c0_12, %c0_13], %13 {strides = array<i32>} : memref<1x4x2x128xf32, #tpu.memory_space<vmem>>, vector<1x1x2x128xf32>,
    %c2 = arith.constant 2 : index
    %14 = memref.load %arg1[%c2] : memref<4xi32, #tpu.memory_space<smem>>
    %c0_14 = arith.constant 0 : index
    %15 = arith.index_cast %14 : i32 to index
    %c0_15 = arith.constant 0 : index
    %c0_16 = arith.constant 0 : index
    %16 = vector.load %arg2[%c0_14, %15, %c0_15, %c0_16] : memref<1x4x2x128xf32, #tpu.memory_space<vmem>>, vector<1x1x2x128xf32>
    %17 = vector.shape_cast %16 : vector<1x1x2x128xf32> to vector<1x2x128xf32>
    %c0_17 = arith.constant 0 : index
    %c2_18 = arith.constant 2 : index
    %c0_19 = arith.constant 0 : index
    %c0_20 = arith.constant 0 : index
    %18 = vector.load %arg3[%c0_17, %c2_18, %c0_19, %c0_20] : memref<1x4x2x128xf32, #tpu.memory_space<vmem>>, vector<1x1x2x128xf32>
    %19 = vector.shape_cast %18 : vector<1x1x2x128xf32> to vector<1x2x128xf32>
    %20 = vector.shape_cast %17 : vector<1x2x128xf32> to vector<1x1x2x128xf32>
    tpu.vector_store %arg3[%c0_17, %c2_18, %c0_19, %c0_20], %20 {strides = array<i32>} : memref<1x4x2x128xf32, #tpu.memory_space<vmem>>, vector<1x1x2x128xf32>,
    %c3 = arith.constant 3 : index
    %21 = memref.load %arg1[%c3] : memref<4xi32, #tpu.memory_space<smem>>
    %c0_21 = arith.constant 0 : index
    %22 = arith.index_cast %21 : i32 to index
    %c0_22 = arith.constant 0 : index
    %c0_23 = arith.constant 0 : index
    %23 = vector.load %arg2[%c0_21, %22, %c0_22, %c0_23] : memref<1x4x2x128xf32, #tpu.memory_space<vmem>>, vector<1x1x2x128xf32>
    %24 = vector.shape_cast %23 : vector<1x1x2x128xf32> to vector<1x2x128xf32>
    %c0_24 = arith.constant 0 : index
    %c3_25 = arith.constant 3 : index
    %c0_26 = arith.constant 0 : index
    %c0_27 = arith.constant 0 : index
    %25 = vector.load %arg3[%c0_24, %c3_25, %c0_26, %c0_27] : memref<1x4x2x128xf32, #tpu.memory_space<vmem>>, vector<1x1x2x128xf32>
    %26 = vector.shape_cast %25 : vector<1x1x2x128xf32> to vector<1x2x128xf32>
    %27 = vector.shape_cast %24 : vector<1x2x128xf32> to vector<1x1x2x128xf32>
    tpu.vector_store %arg3[%c0_24, %c3_25, %c0_26, %c0_27], %27 {strides = array<i32>} : memref<1x4x2x128xf32, #tpu.memory_space<vmem>>, vector<1x1x2x128xf32>,
    return
  }
  func.func @transform_0(%arg0: i32, %arg1: memref<4xi32, #tpu.memory_space<smem>>) -> (i32, i32, i32, i32) {
    %c0_i32 = arith.constant 0 : i32
    %c0_i32_0 = arith.constant 0 : i32
    %c0_i32_1 = arith.constant 0 : i32
    %c0_i32_2 = arith.constant 0 : i32
    return %arg0, %c0_i32, %c0_i32_0, %c0_i32_1 : i32, i32, i32, i32
  }
  func.func @transform_1(%arg0: i32, %arg1: memref<4xi32, #tpu.memory_space<smem>>) -> (i32, i32, i32, i32) {
    %c0_i32 = arith.constant 0 : i32
    %c0_i32_0 = arith.constant 0 : i32
    %c0_i32_1 = arith.constant 0 : i32
    %c0_i32_2 = arith.constant 0 : i32
    return %arg0, %c0_i32, %c0_i32_0, %c0_i32_1 : i32, i32, i32, i32
  }
}

</mosaic_0001>

<llo_original>
// kernel: tpu_custom_call.1
$region0: #{tpu_custom_call.1}
  #allocation0 [shape = 'u32[]', space=smem, size = 0x4, offset = 0x4, fixed_abs, tag = 'smem constant byte address 0x4 - core index']
  #allocation1 [shape = 'u32[144,128]{1,0:T(1,128)}', space=vmem, size = 0x12000, scoped, tag = 'internal scratch']
  #allocation2 [shape = 's32[1]{0}', space=sflag, size = 0x4, scoped, tag = 'scoped memory for tpu_custom_call.1']
  #allocation3 [shape = 'u8[512]{0}', space=smem, size = 0x200, scoped, tag = 'prefetched SMEM operand 0']
  %s0 = inlined_call_operand.hbm [shape: s32[4], index: 0, kind: input, shape index: {}]
  %s1 = inlined_call_operand.hbm [shape: f32[2,4,2,128], index: 1, kind: input, shape index: {}]
  %s2 = inlined_call_operand.hbm [shape: f32[2,4,2,128], index: 2, kind: output, shape index: {}]
  %s3 = sld [smem:[#allocation0]]
  $region41: #{tpu_custom_call.1} parent=0
    _
  %s5 = ssub.s32 1, %s3
  %s6 = scalar_select 0, %s5, %s3
  %8 = dma.hbm_to_smem %s0, 16, [#allocation3], [#allocation2]
  %9 = dma.done [#allocation2], 16
  %10 = sfence
  $region1: #{tpu_custom_call.1} parent=0
    #allocation4 [shape = 'u8[8192]{0}', space=vmem, size = 0x2000, scoped, tag = 'input window, operand 1']
    #allocation5 [shape = 's32[2]{0}', space=sflag, size = 0x8, scoped, tag = 'scoped memory for tpu_custom_call.1']
    #allocation6 [shape = 's32[2]{0}', space=sflag, size = 0x8, scoped, tag = 'scoped memory for tpu_custom_call.1']
    #allocation7 [shape = 'u8[8192]{0}', space=vmem, size = 0x2000, scoped, tag = 'output window, operand 0']
    %11 = vsyncpa [#allocation5], 0
    %s12 = scalar_lea.sflag [#allocation5], 1
    %13 = vsyncpa %s12, 0
    %14 = vsyncpa [#allocation6], 0
    %s15 = scalar_lea.sflag [#allocation6], 1
    %16 = vsyncpa %s15, 0
    loop: start=0, step=1, limit=4
    $region2: #{tpu_custom_call.1} parent=1 // loop_pre_header
      _
    $region3: #{tpu_custom_call.1} parent=1 // loop_header
      %s18 = sphi 0, %s22
      %p19 = scmp.ge.s32.totalorder %s18, 4
      %s28 = sphi 0, %s30
      %s31 = sphi 0, %s28
      %s32 = sphi 0, %s31
      %s48 = sphi 0, %s32
      %s54 = sphi 0, %s56
      %s57 = sphi 0, %s54
      %s58 = sphi 0, %s57
      %s74 = sphi 0, %s58
    $region4: #{tpu_custom_call.1} parent=1 // loop_header_branch
      %21 = sbr.rel (%p19) target = $region8
    $region5: #{tpu_custom_call.1} parent=1 // loop_body
      %s23 = ssub.s32 %s18, 1
      %s24 = ssub.s32 %s18, 2
      %s25 = sadd.s32 %s18, 1
      %s26 = ssub.s32 %s18, %s25
      %p27 = scmp.eq.s32.totalorder %s26, 0
      %s29 = sadd.s32 %s28, 1
      %s30 = scalar_select %p27, %s28, %s29
      %p33 = pneg %p27
      %p34 = scmp.eq.s32.totalorder %s18, 1
      %p35 = por %p33, %p34
      %p36 = scmp.ne.s32.totalorder %s28, %s31
      %p37 = scmp.eq.s32.totalorder %s18, 0
      %p38 = por %p36, %p37
      %p39 = scmp.ne.s32.totalorder %s28, %s31
      %p40 = scmp.eq.s32.totalorder %s23, 1
      %p41 = por %p39, %p40
      %p42 = scmp.ne.s32.totalorder %s31, %s32
      %p43 = scmp.eq.s32.totalorder %s23, 0
      %p44 = por %p42, %p43
      %p45 = scmp.ne.s32.totalorder %s31, %s32
      %p46 = scmp.eq.s32.totalorder %s24, 1
      %p47 = por %p45, %p46
      %p49 = scmp.ne.s32.totalorder %s32, %s48
      %p50 = scmp.eq.s32.totalorder %s24, 0
      %p51 = por %p49, %p50
      %s52 = ssub.s32 %s18, %s25
      %p53 = scmp.eq.s32.totalorder %s52, 0
      %s55 = sadd.s32 %s54, 1
      %s56 = scalar_select %p53, %s54, %s55
      %p59 = pneg %p53
      %p60 = scmp.eq.s32.totalorder %s18, 1
      %p61 = por %p59, %p60
      %p62 = scmp.ne.s32.totalorder %s54, %s57
      %p63 = scmp.eq.s32.totalorder %s18, 0
      %p64 = por %p62, %p63
      %p65 = scmp.ne.s32.totalorder %s54, %s57
      %p66 = scmp.eq.s32.totalorder %s23, 1
      %p67 = por %p65, %p66
      %p68 = scmp.ne.s32.totalorder %s57, %s58
      %p69 = scmp.eq.s32.totalorder %s23, 0
      %p70 = por %p68, %p69
      %p71 = scmp.ne.s32.totalorder %s57, %s58
      %p72 = scmp.eq.s32.totalorder %s24, 1
      %p73 = por %p71, %p72
      %p75 = scmp.ne.s32.totalorder %s58, %s74
      %p76 = scmp.eq.s32.totalorder %s24, 0
      %p77 = por %p75, %p76
      %p78 = scmp.le.s32.totalorder 1, %s18
      %p79 = scmp.lt.s32.totalorder %s18, 3
      %p80 = pnand %p78, %p79
      %p81 = pneg %p80
      // Predicated region
      $region9: #{tpu_custom_call.1} parent=5 // pred_check
        _
      $region10: #{tpu_custom_call.1} parent=5 // pred_check_branch
        %83 = sbr.rel (%p80) target = $region12
      $region11: #{tpu_custom_call.1} parent=5 // pred_region
        %s84 = ssub.s32 %s18, 1
      $region12: #{tpu_custom_call.1} parent=5 // pred_fallthru
        _
      %p85 = scmp.lt.s32.totalorder %s18, 2
      // Predicated region
      $region13: #{tpu_custom_call.1} parent=5 // pred_check
        %p86 = pneg %p85
      $region14: #{tpu_custom_call.1} parent=5 // pred_check_branch
        %88 = sbr.rel (%p86) target = $region16
      $region15: #{tpu_custom_call.1} parent=5 // pred_region
        // Predicated region
        $region17: #{tpu_custom_call.1} parent=15 // pred_check
          %p89 = pneg %p38
        $region18: #{tpu_custom_call.1} parent=15 // pred_check_branch
          %91 = sbr.rel (%p89) target = $region20
        $region19: #{tpu_custom_call.1} parent=15 // pred_region
          %s92 = sand.u32 %s28, 1
          %s93 = scalar_lea.sflag [#allocation5], %s92
          %s94 = sand.u32 %s28, 1
          %s95 = smul.addr %s94, 8
          %s96 = scalar_lea.vmem [#allocation4], %s95
          %s98 = ssub.s32 128, 128
          %99 = vsyncadd %s93, %s98
          %s100 = smul.addr %s18, 4
          %s101 = smul.addr %s100, 32
          %s102 = scalar_lea.hbm %s1, %s101
          %s103 = sshll.u32 %s96, 4
          %s104 = int_to_ptr.vmem [resolvable:$true] %s103
          %109 = dma.hbm_to_vmem [thread:$0]  %s102, 128, %s104, %s93, 32, 32, 2
        $region20: #{tpu_custom_call.1} parent=15 // pred_fallthru
          _
      $region16: #{tpu_custom_call.1} parent=5 // pred_fallthru
        _
      %p110 = scmp.le.s32.totalorder 1, %s18
      %p111 = scmp.lt.s32.totalorder %s18, 3
      %p112 = pnand %p110, %p111
      %p113 = pneg %p112
      // Predicated region
      $region21: #{tpu_custom_call.1} parent=5 // pred_check
        _
      $region22: #{tpu_custom_call.1} parent=5 // pred_check_branch
        %115 = sbr.rel (%p112) target = $region24
      $region23: #{tpu_custom_call.1} parent=5 // pred_region
        %s116 = ssub.s32 %s18, 1
        %s117 = sand.u32 %s31, 1
        %s118 = scalar_lea.sflag [#allocation5], %s117
        %s119 = sand.u32 %s31, 1
        %s120 = smul.addr %s119, 8
        %s121 = scalar_lea.vmem [#allocation4], %s120
        // Predicated region
        $region25: #{tpu_custom_call.1} parent=23 // pred_check
          %p122 = pneg %p44
        $region26: #{tpu_custom_call.1} parent=23 // pred_check_branch
          %124 = sbr.rel (%p122) target = $region28
        $region27: #{tpu_custom_call.1} parent=23 // pred_region
          %125 = dma.done %s118, 128
        $region28: #{tpu_custom_call.1} parent=23 // pred_fallthru
          _
        %s126 = sand.u32 %s31, 1
        %s127 = scalar_lea.sflag [#allocation5], %s126
        %s128 = sand.u32 %s31, 1
        %s129 = smul.addr %s128, 8
        %s130 = scalar_lea.vmem [#allocation4], %s129
        %p131 = pneg %p44
        %p132 = pneg %p41
        %p133 = pneg %p70
        %p134 = pneg %p67
        %s135 = sand.u32 %s57, 1
        %s136 = scalar_lea.sflag [#allocation6], %s135
        %s137 = sand.u32 %s57, 1
        %s138 = smul.addr %s137, 8
        %s139 = scalar_lea.vmem [#allocation7], %s138
        %s140 = sld [smem:[#allocation3]]
        %s141 = smul.u32 %s140, 2
        %s142 = scalar_lea.vmem %s121, %s141 [#allocation4]
        %v143 = vld [vmem:[%s142] sm:$0x3]
        %144 = vst [vmem:[%s139] sm:$0x3] %v143
        %s145 = sld [smem:[#allocation3 + $0x1]]
        %s146 = smul.u32 %s145, 2
        %s147 = scalar_lea.vmem %s121, %s146 [#allocation4]
        %v148 = vld [vmem:[%s147] sm:$0x3]
        %s149 = scalar_lea.vmem %s139, 2 [#allocation7]
        %150 = vst [vmem:[%s149] sm:$0x3] %v148
        %s151 = sld [smem:[#allocation3 + $0x2]]
        %s152 = smul.u32 %s151, 2
        %s153 = scalar_lea.vmem %s121, %s152 [#allocation4]
        %v154 = vld [vmem:[%s153] sm:$0x3]
        %s155 = scalar_lea.vmem %s139, 4 [#allocation7]
        %156 = vst [vmem:[%s155] sm:$0x3] %v154
        %s157 = sld [smem:[#allocation3 + $0x3]]
        %s158 = smul.u32 %s157, 2
        %s159 = scalar_lea.vmem %s121, %s158 [#allocation4]
        %v160 = vld [vmem:[%s159] sm:$0x3]
        %s161 = scalar_lea.vmem %s139, 6 [#allocation7]
        %162 = vst [vmem:[%s161] sm:$0x3] %v160
        %s163 = sand.u32 %s57, 1
        %s164 = scalar_lea.sflag [#allocation6], %s163
        %s165 = sand.u32 %s57, 1
        %s166 = smul.addr %s165, 8
        %s167 = scalar_lea.vmem [#allocation7], %s166
        // Predicated region
        $region29: #{tpu_custom_call.1} parent=23 // pred_check
          %p168 = pneg %p67
        $region30: #{tpu_custom_call.1} parent=23 // pred_check_branch
          %170 = sbr.rel (%p168) target = $region32
        $region31: #{tpu_custom_call.1} parent=23 // pred_region
          %s172 = ssub.s32 128, 128
          %173 = vsyncadd %s164, %s172
          %s174 = smul.addr %s23, 4
          %s175 = smul.addr %s174, 32
          %s176 = scalar_lea.hbm %s2, %s175
          %s177 = sshll.u32 %s167, 4
          %s178 = int_to_ptr.vmem [resolvable:$true] %s177
          %183 = dma.vmem_to_hbm [thread:$0]  %s178, 128, %s176, %s164, 32, 32, 2
        $region32: #{tpu_custom_call.1} parent=23 // pred_fallthru
          _
      $region24: #{tpu_custom_call.1} parent=5 // pred_fallthru
        _
      %p184 = scmp.le.s32.totalorder 2, %s18
      // Predicated region
      $region33: #{tpu_custom_call.1} parent=5 // pred_check
        %p185 = pneg %p184
      $region34: #{tpu_custom_call.1} parent=5 // pred_check_branch
        %187 = sbr.rel (%p185) target = $region36
      $region35: #{tpu_custom_call.1} parent=5 // pred_region
        %s188 = ssub.s32 %s18, 2
        // Predicated region
        $region37: #{tpu_custom_call.1} parent=35 // pred_check
          %p189 = pneg %p73
        $region38: #{tpu_custom_call.1} parent=35 // pred_check_branch
          %191 = sbr.rel (%p189) target = $region40
        $region39: #{tpu_custom_call.1} parent=35 // pred_region
          %s192 = sand.u32 %s58, 1
          %s193 = scalar_lea.sflag [#allocation6], %s192
          %s194 = sand.u32 %s58, 1
          %s195 = smul.addr %s194, 8
          %s196 = scalar_lea.vmem [#allocation7], %s195
          %197 = dma.done %s193, 128
        $region40: #{tpu_custom_call.1} parent=35 // pred_fallthru
          _
      $region36: #{tpu_custom_call.1} parent=5 // pred_fallthru
        _
    $region6: #{tpu_custom_call.1} parent=1 // loop_footer
      %s22 = sadd.s32 1, %s18
    $region7: #{tpu_custom_call.1} parent=1 // loop_footer_branch
      %17 = sbr.rel target = $region3
    $region8: #{tpu_custom_call.1} parent=1 // loop_exit
      _
    %198 = vsyncpa [#allocation5], 1
    %s199 = scalar_lea.sflag [#allocation5], 1
    %200 = vsyncpa %s199, 1
    %201 = vsyncpa [#allocation6], 1
    %s202 = scalar_lea.sflag [#allocation6], 1
    %203 = vsyncpa %s202, 1

</llo_original>
